<compile_context>
chip_gen: v7x
topology: tpu7x:2x2x1
jax: 0.10.0
libtpu: 0.0.40
codegen_flags: <defaults>
</compile_context>

<pallas_src>
import functools

import jax
import jax.numpy as jnp
from jax.experimental import pallas as pl
from jax.experimental.pallas import tpu as pltpu


LN_EPS = 1e-5


# ---------------------------------------------------------------------------
# Kernel: fused visual_projection + ImageProjection linear + per-token LayerNorm
# ---------------------------------------------------------------------------

def _fused_ip_kernel(x_ref, wvp_ref, wip_ref, aff_ref, out_ref, *,
                     tokens_per_tile, cross_dim, eps, direct_store):
    # x_ref:   (Mp, E)  bf16, resident (constant block index -> fetched once)
    # wvp_ref: (E, I)   bf16, resident
    # wip_ref: (I, tn)  bf16, streamed / double-buffered weight tile (dominant bytes)
    # aff_ref: (3, tn)  f32,  [bias ; gamma ; beta] column tile
    # out_ref: (Mp, tn) output tile
    #
    # The tiny visual projection is recomputed every grid step instead of being
    # cached under pl.when(t == 0): the kernel is HBM-bound so the extra MXU
    # work is free, and it keeps the grid axis truly "parallel" (megacore-safe
    # on v7x, where a scratch written only at step 0 would not be visible to
    # the second TensorCore).
    h = jnp.dot(x_ref[...], wvp_ref[...], preferred_element_type=jnp.float32)
    y = jnp.dot(h.astype(wip_ref.dtype), wip_ref[...],
                preferred_element_type=jnp.float32)

    aff = aff_ref[...]
    y = y + aff[0:1, :]          # bias
    gamma = aff[1:2, :]
    beta = aff[2:3, :]

    if direct_store:
        # C % 128 == 0: per-token stores are lane-dense; live set stays ~2 tokens.
        for t in range(tokens_per_tile):
            sl = slice(t * cross_dim, (t + 1) * cross_dim)
            yt = y[:, sl]
            mean = jnp.mean(yt, axis=-1, keepdims=True)
            var = jnp.mean((yt - mean) ** 2, axis=-1, keepdims=True)
            yn = (yt - mean) * jax.lax.rsqrt(var + eps)
            out_ref[:, sl] = (yn * gamma[:, sl] + beta[:, sl]).astype(out_ref.dtype)
    else:
        # Sub-128-lane tokens (e.g. cross_attention_dim = 32): build the full
        # tile and do one lane-dense store instead of many masked sub-lane vst's.
        chunks = []
        for t in range(tokens_per_tile):
            sl = slice(t * cross_dim, (t + 1) * cross_dim)
            yt = y[:, sl]
            mean = jnp.mean(yt, axis=-1, keepdims=True)
            var = jnp.mean((yt - mean) ** 2, axis=-1, keepdims=True)
            chunks.append((yt - mean) * jax.lax.rsqrt(var + eps))
        yn = chunks[0] if tokens_per_tile == 1 else jnp.concatenate(chunks, axis=-1)
        out_ref[...] = (yn * gamma + beta).astype(out_ref.dtype)


# ---------------------------------------------------------------------------
# Tiling / VMEM helpers
# ---------------------------------------------------------------------------

def _vmem_capacity_bytes():
    try:
        return int(pltpu.get_tpu_info().vmem_capacity_bytes)
    except Exception:
        return 64 << 20  # conservative fallback: v7x per-TensorCore VMEM


def _pick_tile_cols(TC, C, I, wip_itemsize, target_bytes, prefer_even_tiles=True):
    """Column-tile width tn such that (a) tn is a whole number of tokens,
    (b) tn divides TC, (c) tn is lane-aligned (% 128 == 0) or the full width,
    (d) the double-buffered streamed weight tile fits in target_bytes, and
    (e) the tile count is even when possible (v7x megacore load balance)."""
    candidates = []
    for tokens in range(1, TC // C + 1):
        tn = tokens * C
        if TC % tn != 0:
            continue
        if tn % 128 != 0 and tn != TC:
            continue
        if 2 * I * tn * wip_itemsize <= target_bytes:
            candidates.append(tn)
    if not candidates:
        # A tile must hold at least one whole token (LayerNorm needs the full
        # token); fall back to the smallest legal tile even if over budget.
        for tokens in range(1, TC // C + 1):
            tn = tokens * C
            if TC % tn == 0 and (tn % 128 == 0 or tn == TC):
                candidates.append(tn)
                break
        if not candidates:
            candidates = [TC]
    even = [tn for tn in candidates if (TC // tn) % 2 == 0]
    pool = even if (prefer_even_tiles and even) else candidates
    return max(pool)


# ---------------------------------------------------------------------------
# Wrappers
# ---------------------------------------------------------------------------

def _ip_adapter_projection(x2, w_vp, w_ip, affine, *, num_tokens, eps,
                           tile_target_bytes, out_dtype):
    """x2: (M, E) rows for one adapter; returns (M, num_tokens * C)."""
    M, E = x2.shape
    I = w_vp.shape[1]
    TC = w_ip.shape[1]
    assert w_ip.shape[0] == I, (w_ip.shape, I)
    assert TC % num_tokens == 0, (TC, num_tokens)
    C = TC // num_tokens

    # Pad rows to a full sublane so MXU operands / output stores are unmasked.
    Mp = ((M + 7) // 8) * 8
    x_p = x2 if Mp == M else jnp.pad(x2, ((0, Mp - M), (0, 0)))
    x_p = x_p.astype(w_vp.dtype)

    vmem_cap = _vmem_capacity_bytes()
    target = int(min(tile_target_bytes, vmem_cap // 4))   # generation-aware clamp
    tn = _pick_tile_cols(TC, C, I, jnp.dtype(w_ip.dtype).itemsize, target)
    tokens_per_tile = tn // C
    n_tiles = TC // tn

    # Actual VMEM footprint (BlockSpec double-buffers every operand).
    def _isz(a):
        return jnp.dtype(a.dtype).itemsize
    footprint = (2 * Mp * E * _isz(x_p)
                 + 2 * E * I * _isz(w_vp)
                 + 2 * I * tn * _isz(w_ip)
                 + 2 * 3 * tn * 4
                 + 2 * Mp * tn * jnp.dtype(out_dtype).itemsize)
    cap = max(vmem_cap - (4 << 20), 16 << 20)
    vmem_limit = int(min(max(footprint + (4 << 20), 16 << 20), cap))

    kernel = functools.partial(
        _fused_ip_kernel, tokens_per_tile=tokens_per_tile, cross_dim=C,
        eps=eps, direct_store=(C % 128 == 0))

    y = pl.pallas_call(
        kernel,
        out_shape=jax.ShapeDtypeStruct((Mp, TC), out_dtype),
        grid=(n_tiles,),
        in_specs=[
            pl.BlockSpec((Mp, E), lambda t: (0, 0)),   # resident activations
            pl.BlockSpec((E, I), lambda t: (0, 0)),    # resident visual-proj weight
            pl.BlockSpec((I, tn), lambda t: (0, t)),   # streamed bf16 weight tiles
            pl.BlockSpec((3, tn), lambda t: (0, t)),   # [bias; gamma; beta] tile
        ],
        out_specs=pl.BlockSpec((Mp, tn), lambda t: (0, t)),
        compiler_params=pltpu.CompilerParams(
            dimension_semantics=("parallel",),
            vmem_limit_bytes=vmem_limit,
        ),
    )(x_p, w_vp, w_ip, affine)
    return y[:M] if Mp != M else y


def prepare_params(raw_params, *, weight_dtype=jnp.bfloat16):
    """One-time parameter setup: cast weight streams to bf16 and fold
    bias / gamma / beta into one (3, TC) array per adapter."""
    adapters = []
    for p in raw_params["adapters"]:
        T = p["num_tokens"]
        TC = p["w_ip"].shape[1]
        C = TC // T
        affine = jnp.concatenate([
            p["b_ip"].reshape(1, TC),
            jnp.tile(p["gamma"].reshape(1, C), (1, T)),
            jnp.tile(p["beta"].reshape(1, C), (1, T)),
        ], axis=0).astype(jnp.float32)
        adapters.append(dict(
            w_ip=p["w_ip"].astype(weight_dtype),
            affine=affine,
            num_tokens=T,
            cross_dim=C,
        ))
    return dict(w_vp=raw_params["w_vp"].astype(weight_dtype), adapters=adapters)


def multi_ip_adapter_with_visual_projection(image_embeds_list, prepared, *,
                                            eps=LN_EPS,
                                            tile_target_bytes=28 << 20):
    """Forward pass of the whole module. Returns a list of [B, N, T, C] arrays."""
    # TODO(synk): adapters sharing the intermediate dim could be fused into a
    # single pallas_call (column-concatenated w_ip + scalar-prefetched token
    # geometry) to avoid per-adapter dispatch / pipeline ramp; kept per-adapter.
    outs = []
    for x, p in zip(image_embeds_list, prepared["adapters"]):
        B, N, _ = x.shape
        T, C = p["num_tokens"], p["cross_dim"]
        y = _ip_adapter_projection(
            x.reshape(B * N, -1), prepared["w_vp"], p["w_ip"], p["affine"],
            num_tokens=T, eps=eps, tile_target_bytes=tile_target_bytes,
            out_dtype=x.dtype)
        outs.append(y.reshape(B, N, T, C))
    return outs


# ---------------------------------------------------------------------------
# Pure-JAX reference (uses the same bf16-cast weights the kernel streams)
# ---------------------------------------------------------------------------

def _reference(image_embeds_list, raw_params, *, weight_dtype=jnp.bfloat16,
               eps=LN_EPS):
    w_vp = raw_params["w_vp"].astype(weight_dtype).astype(jnp.float32)
    outs = []
    for x, p in zip(image_embeds_list, raw_params["adapters"]):
        B, N, _ = x.shape
        T = p["num_tokens"]
        TC = p["w_ip"].shape[1]
        C = TC // T
        w_ip = p["w_ip"].astype(weight_dtype).astype(jnp.float32)
        h = x.astype(weight_dtype).astype(jnp.float32) @ w_vp   # visual_projection
        h = h.reshape(B * N, -1)
        y = h.astype(weight_dtype).astype(jnp.float32) @ w_ip + p["b_ip"][0]
        y = y.reshape(B * N, T, C)
        mean = jnp.mean(y, axis=-1, keepdims=True)
        var = jnp.mean((y - mean) ** 2, axis=-1, keepdims=True)
        y = (y - mean) * jax.lax.rsqrt(var + eps)
        y = y * p["gamma"][0] + p["beta"][0]
        outs.append(y.reshape(B, N, T, C))
    return outs


if __name__ == "__main__":
    key = jax.random.PRNGKey(0)

    # Small synthetic configuration.
    embedding_dim = 32                 # visual_projection in_features
    intermediate_embedding_dim = 64    # visual_projection out_features
    cross_attention_dim = 32
    batch = 2

    k_vp, k_w0, k_b0, k_g0, k_bt0, k_w1, k_b1, k_g1, k_bt1, k_x0, k_x1 = \
        jax.random.split(key, 11)

    # Weights stored as [in, out] for x @ W.
    w_vp = jax.random.normal(k_vp, (embedding_dim, intermediate_embedding_dim),
                             jnp.float32) * 0.05

    def make_adapter(kw, kb, kg, kbt, num_tokens):
        TC = num_tokens * cross_attention_dim
        return dict(
            w_ip=jax.random.normal(kw, (intermediate_embedding_dim, TC),
                                   jnp.float32) * 0.05,
            b_ip=jax.random.normal(kb, (1, TC), jnp.float32) * 0.02,
            gamma=1.0 + 0.1 * jax.random.normal(kg, (1, cross_attention_dim),
                                                jnp.float32),
            beta=0.1 * jax.random.normal(kbt, (1, cross_attention_dim),
                                         jnp.float32),
            num_tokens=num_tokens,
        )

    raw_params = dict(
        w_vp=w_vp,
        adapters=[
            make_adapter(k_w0, k_b0, k_g0, k_bt0, num_tokens=4),    # TC = 128
            make_adapter(k_w1, k_b1, k_g1, k_bt1, num_tokens=16),   # TC = 512
        ],
    )
    prepared = prepare_params(raw_params)   # bf16 weight cast happens ONCE here

    # Two IP-adapter image embeds with different num_images (List[Tensor] input).
    image_embeds = [
        jax.random.normal(k_x0, (batch, 2, embedding_dim), jnp.float32),
        jax.random.normal(k_x1, (batch, 1, embedding_dim), jnp.float32),
    ]

    # Small tile budget here so the second adapter actually exercises the
    # multi-tile streaming grid (tn = 256 -> 2 tiles); production would use
    # the default 28 MiB budget.
    outs = multi_ip_adapter_with_visual_projection(
        image_embeds, prepared, tile_target_bytes=64 * 1024)
    outs = [jax.block_until_ready(o) for o in outs]

    refs = _reference(image_embeds, raw_params)
    for o, r in zip(outs, refs):
        assert o.shape == r.shape, (o.shape, r.shape)
        err = float(jnp.max(jnp.abs(o.astype(jnp.float32) - r)))
        # LayerNorm outputs are O(1); 1e-2 comfortably covers bf16-path
        # summation-order noise while catching any real tiling/indexing bug.
        assert err < 1e-2, err

    print("KERNEL_OK")
</pallas_src>

<mosaic_0001>
module attributes {stable_mosaic.version = 11 : i64} {
  func.func @_fused_ip_kernel(%arg0: i32, %arg1: memref<8x32xbf16, #tpu.memory_space<vmem>>, %arg2: memref<32x64xbf16, #tpu.memory_space<vmem>>, %arg3: memref<64x128xbf16, #tpu.memory_space<vmem>>, %arg4: memref<3x128xf32, #tpu.memory_space<vmem>>, %arg5: memref<8x128xf32, #tpu.memory_space<vmem>>) attributes {dimension_semantics = [#tpu.dimension_semantics<parallel>], iteration_bounds = array<i64: 1>, scalar_prefetch = 0 : i64, scratch_operands = 0 : i64, tpu.core_type = #tpu.core_type<tc>, window_params = [{pipeline_mode = #tpu.pipeline_mode<synchronous>, transform_indices = @transform_0, window_bounds = array<i64: 8, 32>}, {pipeline_mode = #tpu.pipeline_mode<synchronous>, transform_indices = @transform_1, window_bounds = array<i64: 32, 64>}, {transform_indices = @transform_2, window_bounds = array<i64: 64, 128>}, {transform_indices = @transform_3, window_bounds = array<i64: 3, 128>}, {transform_indices = @transform_4, window_bounds = array<i64: 8, 128>}]} {
    %c0 = arith.constant 0 : index
    %c0_0 = arith.constant 0 : index
    %0 = vector.load %arg1[%c0, %c0_0] : memref<8x32xbf16, #tpu.memory_space<vmem>>, vector<8x32xbf16>
    %c0_1 = arith.constant 0 : index
    %c0_2 = arith.constant 0 : index
    %1 = vector.load %arg2[%c0_1, %c0_2] : memref<32x64xbf16, #tpu.memory_space<vmem>>, vector<32x64xbf16>
    %cst = arith.constant dense<0.000000e+00> : vector<8x64xf32>
    %2 = tpu.matmul %0, %1, %cst {dimension_numbers = #tpu.dot_dimension_numbers<[1], [0], [0], [1], [0, 0, 1, 1], [], []>} : vector<8x32xbf16>, vector<32x64xbf16>, vector<8x64xf32> -> vector<8x64xf32>
    %3 = arith.truncf %2 : vector<8x64xf32> to vector<8x64xbf16>
    %c0_3 = arith.constant 0 : index
    %c0_4 = arith.constant 0 : index
    %4 = vector.load %arg3[%c0_3, %c0_4] : memref<64x128xbf16, #tpu.memory_space<vmem>>, vector<64x128xbf16>
    %cst_5 = arith.constant dense<0.000000e+00> : vector<8x128xf32>
    %5 = tpu.matmul %3, %4, %cst_5 {dimension_numbers = #tpu.dot_dimension_numbers<[1], [0], [0], [1], [0, 0, 1, 1], [], []>} : vector<8x64xbf16>, vector<64x128xbf16>, vector<8x128xf32> -> vector<8x128xf32>
    %c0_6 = arith.constant 0 : index
    %c0_7 = arith.constant 0 : index
    %6 = vector.load %arg4[%c0_6, %c0_7] : memref<3x128xf32, #tpu.memory_space<vmem>>, vector<3x128xf32>
    %7 = vector.extract_strided_slice %6 {offsets = [0, 0], sizes = [1, 128], strides = [1, 1]} : vector<3x128xf32> to vector<1x128xf32>
    %8 = vector.broadcast %7 : vector<1x128xf32> to vector<8x128xf32>
    %9 = arith.addf %5, %8 : vector<8x128xf32>
    %10 = vector.extract_strided_slice %6 {offsets = [1, 0], sizes = [1, 128], strides = [1, 1]} : vector<3x128xf32> to vector<1x128xf32>
    %11 = vector.extract_strided_slice %6 {offsets = [2, 0], sizes = [1, 128], strides = [1, 1]} : vector<3x128xf32> to vector<1x128xf32>
    %12 = vector.extract_strided_slice %9 {offsets = [0, 0], sizes = [8, 32], strides = [1, 1]} : vector<8x128xf32> to vector<8x32xf32>
    %cst_8 = arith.constant dense<0.000000e+00> : vector<8xf32>
    %13 = vector.multi_reduction <add>, %12, %cst_8 [1] : vector<8x32xf32> to vector<8xf32>
    %14 = vector.shape_cast %13 : vector<8xf32> to vector<8x1xf32>
    %cst_9 = arith.constant 3.200000e+01 : f32
    %15 = vector.broadcast %cst_9 : f32 to vector<8x1xf32>
    %16 = arith.divf %14, %15 : vector<8x1xf32>
    %17 = vector.broadcast %16 : vector<8x1xf32> to vector<8x32xf32>
    %18 = arith.subf %12, %17 : vector<8x32xf32>
    %19 = arith.mulf %18, %18 : vector<8x32xf32>
    %cst_10 = arith.constant dense<0.000000e+00> : vector<8xf32>
    %20 = vector.multi_reduction <add>, %19, %cst_10 [1] : vector<8x32xf32> to vector<8xf32>
    %21 = vector.shape_cast %20 : vector<8xf32> to vector<8x1xf32>
    %cst_11 = arith.constant 3.200000e+01 : f32
    %22 = vector.broadcast %cst_11 : f32 to vector<8x1xf32>
    %23 = arith.divf %21, %22 : vector<8x1xf32>
    %24 = vector.broadcast %16 : vector<8x1xf32> to vector<8x32xf32>
    %25 = arith.subf %12, %24 : vector<8x32xf32>
    %cst_12 = arith.constant 9.99999974E-6 : f32
    %26 = vector.broadcast %cst_12 : f32 to vector<8x1xf32>
    %27 = arith.addf %23, %26 : vector<8x1xf32>
    %28 = math.rsqrt %27 : vector<8x1xf32>
    %29 = vector.broadcast %28 : vector<8x1xf32> to vector<8x32xf32>
    %30 = arith.mulf %25, %29 : vector<8x32xf32>
    %31 = vector.extract_strided_slice %9 {offsets = [0, 32], sizes = [8, 32], strides = [1, 1]} : vector<8x128xf32> to vector<8x32xf32>
    %cst_13 = arith.constant dense<0.000000e+00> : vector<8xf32>
    %32 = vector.multi_reduction <add>, %31, %cst_13 [1] : vector<8x32xf32> to vector<8xf32>
    %33 = vector.shape_cast %32 : vector<8xf32> to vector<8x1xf32>
    %cst_14 = arith.constant 3.200000e+01 : f32
    %34 = vector.broadcast %cst_14 : f32 to vector<8x1xf32>
    %35 = arith.divf %33, %34 : vector<8x1xf32>
    %36 = vector.broadcast %35 : vector<8x1xf32> to vector<8x32xf32>
    %37 = arith.subf %31, %36 : vector<8x32xf32>
    %38 = arith.mulf %37, %37 : vector<8x32xf32>
    %cst_15 = arith.constant dense<0.000000e+00> : vector<8xf32>
    %39 = vector.multi_reduction <add>, %38, %cst_15 [1] : vector<8x32xf32> to vector<8xf32>
    %40 = vector.shape_cast %39 : vector<8xf32> to vector<8x1xf32>
    %cst_16 = arith.constant 3.200000e+01 : f32
    %41 = vector.broadcast %cst_16 : f32 to vector<8x1xf32>
    %42 = arith.divf %40, %41 : vector<8x1xf32>
    %43 = vector.broadcast %35 : vector<8x1xf32> to vector<8x32xf32>
    %44 = arith.subf %31, %43 : vector<8x32xf32>
    %cst_17 = arith.constant 9.99999974E-6 : f32
    %45 = vector.broadcast %cst_17 : f32 to vector<8x1xf32>
    %46 = arith.addf %42, %45 : vector<8x1xf32>
    %47 = math.rsqrt %46 : vector<8x1xf32>
    %48 = vector.broadcast %47 : vector<8x1xf32> to vector<8x32xf32>
    %49 = arith.mulf %44, %48 : vector<8x32xf32>
    %50 = vector.extract_strided_slice %9 {offsets = [0, 64], sizes = [8, 32], strides = [1, 1]} : vector<8x128xf32> to vector<8x32xf32>
    %cst_18 = arith.constant dense<0.000000e+00> : vector<8xf32>
    %51 = vector.multi_reduction <add>, %50, %cst_18 [1] : vector<8x32xf32> to vector<8xf32>
    %52 = vector.shape_cast %51 : vector<8xf32> to vector<8x1xf32>
    %cst_19 = arith.constant 3.200000e+01 : f32
    %53 = vector.broadcast %cst_19 : f32 to vector<8x1xf32>
    %54 = arith.divf %52, %53 : vector<8x1xf32>
    %55 = vector.broadcast %54 : vector<8x1xf32> to vector<8x32xf32>
    %56 = arith.subf %50, %55 : vector<8x32xf32>
    %57 = arith.mulf %56, %56 : vector<8x32xf32>
    %cst_20 = arith.constant dense<0.000000e+00> : vector<8xf32>
    %58 = vector.multi_reduction <add>, %57, %cst_20 [1] : vector<8x32xf32> to vector<8xf32>
    %59 = vector.shape_cast %58 : vector<8xf32> to vector<8x1xf32>
    %cst_21 = arith.constant 3.200000e+01 : f32
    %60 = vector.broadcast %cst_21 : f32 to vector<8x1xf32>
    %61 = arith.divf %59, %60 : vector<8x1xf32>
    %62 = vector.broadcast %54 : vector<8x1xf32> to vector<8x32xf32>
    %63 = arith.subf %50, %62 : vector<8x32xf32>
    %cst_22 = arith.constant 9.99999974E-6 : f32
    %64 = vector.broadcast %cst_22 : f32 to vector<8x1xf32>
    %65 = arith.addf %61, %64 : vector<8x1xf32>
    %66 = math.rsqrt %65 : vector<8x1xf32>
    %67 = vector.broadcast %66 : vector<8x1xf32> to vector<8x32xf32>
    %68 = arith.mulf %63, %67 : vector<8x32xf32>
    %69 = vector.extract_strided_slice %9 {offsets = [0, 96], sizes = [8, 32], strides = [1, 1]} : vector<8x128xf32> to vector<8x32xf32>
    %cst_23 = arith.constant dense<0.000000e+00> : vector<8xf32>
    %70 = vector.multi_reduction <add>, %69, %cst_23 [1] : vector<8x32xf32> to vector<8xf32>
    %71 = vector.shape_cast %70 : vector<8xf32> to vector<8x1xf32>
    %cst_24 = arith.constant 3.200000e+01 : f32
    %72 = vector.broadcast %cst_24 : f32 to vector<8x1xf32>
    %73 = arith.divf %71, %72 : vector<8x1xf32>
    %74 = vector.broadcast %73 : vector<8x1xf32> to vector<8x32xf32>
    %75 = arith.subf %69, %74 : vector<8x32xf32>
    %76 = arith.mulf %75, %75 : vector<8x32xf32>
    %cst_25 = arith.constant dense<0.000000e+00> : vector<8xf32>
    %77 = vector.multi_reduction <add>, %76, %cst_25 [1] : vector<8x32xf32> to vector<8xf32>
    %78 = vector.shape_cast %77 : vector<8xf32> to vector<8x1xf32>
    %cst_26 = arith.constant 3.200000e+01 : f32
    %79 = vector.broadcast %cst_26 : f32 to vector<8x1xf32>
    %80 = arith.divf %78, %79 : vector<8x1xf32>
    %81 = vector.broadcast %73 : vector<8x1xf32> to vector<8x32xf32>
    %82 = arith.subf %69, %81 : vector<8x32xf32>
    %cst_27 = arith.constant 9.99999974E-6 : f32
    %83 = vector.broadcast %cst_27 : f32 to vector<8x1xf32>
    %84 = arith.addf %80, %83 : vector<8x1xf32>
    %85 = math.rsqrt %84 : vector<8x1xf32>
    %86 = vector.broadcast %85 : vector<8x1xf32> to vector<8x32xf32>
    %87 = arith.mulf %82, %86 : vector<8x32xf32>
    %88 = tpu.concatenate %30, %49, %68, %87 in 1 : vector<8x32xf32>, vector<8x32xf32>, vector<8x32xf32>, vector<8x32xf32> -> vector<8x128xf32>
    %89 = vector.broadcast %10 : vector<1x128xf32> to vector<8x128xf32>
    %90 = arith.mulf %88, %89 : vector<8x128xf32>
    %91 = vector.broadcast %11 : vector<1x128xf32> to vector<8x128xf32>
    %92 = arith.addf %90, %91 : vector<8x128xf32>
    %c0_28 = arith.constant 0 : index
    %c0_29 = arith.constant 0 : index
    %93 = vector.load %arg5[%c0_28, %c0_29] : memref<8x128xf32, #tpu.memory_space<vmem>>, vector<8x128xf32>
    tpu.vector_store %arg5[%c0_28, %c0_29], %92 {strides = array<i32>} : memref<8x128xf32, #tpu.memory_space<vmem>>, vector<8x128xf32>,
    return
  }
  func.func @transform_0(%arg0: i32) -> (i32, i32) {
    %c0_i32 = arith.constant 0 : i32
    %c0_i32_0 = arith.constant 0 : i32
    %c0_i32_1 = arith.constant 0 : i32
    return %c0_i32, %c0_i32_0 : i32, i32
  }
  func.func @transform_1(%arg0: i32) -> (i32, i32) {
    %c0_i32 = arith.constant 0 : i32
    %c0_i32_0 = arith.constant 0 : i32
    %c0_i32_1 = arith.constant 0 : i32
    return %c0_i32, %c0_i32_0 : i32, i32
  }
  func.func @transform_2(%arg0: i32) -> (i32, i32) {
    %c0_i32 = arith.constant 0 : i32
    %c0_i32_0 = arith.constant 0 : i32
    return %c0_i32, %arg0 : i32, i32
  }
  func.func @transform_3(%arg0: i32) -> (i32, i32) {
    %c0_i32 = arith.constant 0 : i32
    %c0_i32_0 = arith.constant 0 : i32
    return %c0_i32, %arg0 : i32, i32
  }
  func.func @transform_4(%arg0: i32) -> (i32, i32) {
    %c0_i32 = arith.constant 0 : i32
    %c0_i32_0 = arith.constant 0 : i32
    return %c0_i32, %arg0 : i32, i32
  }
}

</mosaic_0001>

<llo_original>
// kernel: tpu_custom_call.1
$region0: #{tpu_custom_call.1}
  #allocation0 [shape = 'u32[]', space=smem, size = 0x4, offset = 0x4, fixed_abs, tag = 'smem constant byte address 0x4 - core index']
  #allocation1 [shape = 'u32[144,128]{1,0:T(1,128)}', space=vmem, size = 0x12000, scoped, tag = 'internal scratch']
  %s0 = inlined_call_operand.hbm [shape: bf16[8,32], index: 0, kind: input, shape index: {}]
  %s1 = inlined_call_operand.hbm [shape: bf16[32,64], index: 1, kind: input, shape index: {}]
  %s2 = inlined_call_operand.hbm [shape: bf16[64,128], index: 2, kind: input, shape index: {}]
  %s3 = inlined_call_operand.vmem [shape: f32[3,128], index: 3, kind: input, shape index: {}]
  %s4 = inlined_call_operand.hbm [shape: f32[8,128], index: 4, kind: output, shape index: {}]
  %s5 = sld [smem:[#allocation0]]
  $region38: #{tpu_custom_call.1} parent=0
    _
  %s7 = ssub.s32 1, %s5
  %s8 = scalar_select 0, %s7, %s5
  $region1: #{tpu_custom_call.1} parent=0
    #allocation2 [shape = 'u8[2048]{0}', space=vmem, size = 0x800, scoped, tag = 'input window, operand 0, single buffered']
    #allocation3 [shape = 's32[1]{0}', space=sflag, size = 0x4, scoped, tag = 'scoped memory for tpu_custom_call.1']
    #allocation4 [shape = 's32[1]{0}', space=sflag, size = 0x4, scoped, tag = 'scoped memory for tpu_custom_call.1']
    #allocation5 [shape = 'u8[8192]{0}', space=vmem, size = 0x2000, scoped, tag = 'input window, operand 1, single buffered']
    #allocation6 [shape = 's32[1]{0}', space=sflag, size = 0x4, scoped, tag = 'scoped memory for tpu_custom_call.1']
    #allocation7 [shape = 'u8[16384]{0}', space=vmem, size = 0x4000, scoped, tag = 'input window, operand 2, single buffered']
    #allocation8 [shape = 'u8[4096]{0}', space=vmem, size = 0x1000, scoped, tag = 'output window, operand 0, single buffered']
    %9 = vsyncpa [#allocation3], 0
    %10 = vsyncpa [#allocation6], 0
    %11 = vsyncpa [#allocation4], 0
    // Predicated region
    $region2: #{tpu_custom_call.1} parent=1 // pred_check
      _
    $region3: #{tpu_custom_call.1} parent=1 // pred_check_branch
      %13 = sbr.rel (0) target = $region5
    $region4: #{tpu_custom_call.1} parent=1 // pred_region
      %s15 = ssub.s32 64, 64
      %16 = vsyncadd [#allocation3], %s15
      %s18 = sshll.u32 [#allocation2], 4
      %s19 = int_to_ptr.vmem [resolvable:$true] %s18
      %21 = dma.hbm_to_vmem [thread:$0]  %s0, 64, %s19, [#allocation3]
    $region5: #{tpu_custom_call.1} parent=1 // pred_fallthru
      _
    // Predicated region
    $region6: #{tpu_custom_call.1} parent=1 // pred_check
      _
    $region7: #{tpu_custom_call.1} parent=1 // pred_check_branch
      %23 = sbr.rel (0) target = $region9
    $region8: #{tpu_custom_call.1} parent=1 // pred_region
      %s25 = ssub.s32 256, 256
      %26 = vsyncadd [#allocation6], %s25
      %s27 = sshll.u32 [#allocation5], 4
      %s28 = int_to_ptr.vmem [resolvable:$true] %s27
      %33 = dma.hbm_to_vmem [thread:$0]  %s1, 256, %s28, [#allocation6], 64, 64, 4
    $region9: #{tpu_custom_call.1} parent=1 // pred_fallthru
      _
    // Predicated region
    $region10: #{tpu_custom_call.1} parent=1 // pred_check
      _
    $region11: #{tpu_custom_call.1} parent=1 // pred_check_branch
      %35 = sbr.rel (0) target = $region13
    $region12: #{tpu_custom_call.1} parent=1 // pred_region
      %s37 = ssub.s32 512, 512
      %38 = vsyncadd [#allocation6], %s37
      %s39 = sshll.u32 [#allocation7], 4
      %s40 = int_to_ptr.vmem [resolvable:$true] %s39
      %45 = dma.hbm_to_vmem [thread:$0]  %s2, 512, %s40, [#allocation6], 64, 64, 4
    $region13: #{tpu_custom_call.1} parent=1 // pred_fallthru
      _
    // Predicated region
    $region14: #{tpu_custom_call.1} parent=1 // pred_check
      _
    $region15: #{tpu_custom_call.1} parent=1 // pred_check_branch
      %47 = sbr.rel (0) target = $region17
    $region16: #{tpu_custom_call.1} parent=1 // pred_region
      _
    $region17: #{tpu_custom_call.1} parent=1 // pred_fallthru
      _
    // Predicated region
    $region18: #{tpu_custom_call.1} parent=1 // pred_check
      _
    $region19: #{tpu_custom_call.1} parent=1 // pred_check_branch
      %49 = sbr.rel (0) target = $region21
    $region20: #{tpu_custom_call.1} parent=1 // pred_region
      %50 = dma.done [#allocation3], 64
    $region21: #{tpu_custom_call.1} parent=1 // pred_fallthru
      _
    // Predicated region
    $region22: #{tpu_custom_call.1} parent=1 // pred_check
      _
    $region23: #{tpu_custom_call.1} parent=1 // pred_check_branch
      %52 = sbr.rel (0) target = $region25
    $region24: #{tpu_custom_call.1} parent=1 // pred_region
      %53 = dma.done [#allocation6], 256
    $region25: #{tpu_custom_call.1} parent=1 // pred_fallthru
      _
    // Predicated region
    $region26: #{tpu_custom_call.1} parent=1 // pred_check
      _
    $region27: #{tpu_custom_call.1} parent=1 // pred_check_branch
      %55 = sbr.rel (0) target = $region29
    $region28: #{tpu_custom_call.1} parent=1 // pred_region
      %56 = dma.done [#allocation6], 512
    $region29: #{tpu_custom_call.1} parent=1 // pred_fallthru
      _
    %v58 = vld [vmem:[#allocation2] sm:$0xf]
    %v59 = vld [vmem:[#allocation5] sm:$0xf]
    %v60 = vld [vmem:[#allocation5 + $0x4] sm:$0xf]
    %v61 = vld [vmem:[#allocation5 + $0x8] sm:$0xf]
    %v62 = vld [vmem:[#allocation5 + $0xc] sm:$0xf]
    %v67 = vunpack.c.l.b16 %v59
    %v68 = vunpack.c.l.b16 %v60
    %v69 = vunpack.c.l.b16 %v61
    %v70 = vunpack.c.l.b16 %v62
    %v71 = vpack.c.b16 %v68, %v67
    %v72 = vpack.c.b16 %v70, %v69
    %vm75 = vcmask 261120
    %v77 = vsel %vm75, %v58, 0
    %79 = vmatprep.subr.bf16.mxu0 0
    %80 = vmatpush1.bf16.msra.mxu0 %v71
    %81 = vmatprep.subr.bf16.mxu0 0
    %82 = vmatpush1.bf16.msra.mxu0 %v72
    %83 = vmatprep.subr.bf16.mxu0 0
    %84 = vmatpush1.bf16.msra.mxu0 0
    %85 = vmatprep.subr.bf16.mxu0 0
    %86 = vmatpush1.bf16.msra.mxu0 0
    %87 = vmatprep.subr.bf16.mxu0 0
    %88 = vmatpush1.bf16.msra.mxu0 0
    %89 = vmatprep.subr.bf16.mxu0 0
    %90 = vmatpush1.bf16.msra.mxu0 0
    %91 = vmatprep.subr.bf16.mxu0 0
    %92 = vmatpush1.bf16.msra.mxu0 0
    %93 = vmatprep.subr.bf16.mxu0 0
    %94 = vmatpush1.bf16.msra.mxu0 0
    %95 = vmatprep.subr.bf16.mxu0 0
    %96 = vmatpush1.bf16.msra.mxu0 0
    %97 = vmatprep.subr.bf16.mxu0 0
    %98 = vmatpush1.bf16.msra.mxu0 0
    %99 = vmatprep.subr.bf16.mxu0 0
    %100 = vmatpush1.bf16.msra.mxu0 0
    %101 = vmatprep.subr.bf16.mxu0 0
    %102 = vmatpush1.bf16.msra.mxu0 0
    %103 = vmatprep.subr.bf16.mxu0 0
    %104 = vmatpush1.bf16.msra.mxu0 0
    %105 = vmatprep.subr.bf16.mxu0 0
    %106 = vmatpush1.bf16.msra.mxu0 0
    %107 = vmatprep.subr.bf16.mxu0 0
    %108 = vmatpush1.bf16.msra.mxu0 0
    %109 = vmatprep.subr.bf16.mxu0 0
    %110 = vmatpush1.bf16.msra.mxu0 0
    %111 = vmatprep.mubr.bf16.mxu0 0
    %112 = vmatmul.mubr.bf16.gmra.mrb[0].mxu0 %v77
    %v113 = vpop.f32.mrb[0].mxu0
    %v114 = vadd.f32 0.0, %v113
    %v115 = vpop.f32.mrb[0].mxu0
    %v116 = vpop.f32.mrb[0].mxu0
    %v117 = vpop.f32.mrb[0].mxu0
    %118 = vdwg.mxu0
    %v119 = vpack.c.bf16 %v114, %v114
    %v120 = vld [vmem:[#allocation7] sm:$0xf]
    %v121 = vld [vmem:[#allocation7 + $0x4] sm:$0xf]
    %v122 = vld [vmem:[#allocation7 + $0x8] sm:$0xf]
    %v123 = vld [vmem:[#allocation7 + $0xc] sm:$0xf]
    %v124 = vld [vmem:[#allocation7 + $0x10] sm:$0xf]
    %v125 = vld [vmem:[#allocation7 + $0x14] sm:$0xf]
    %v126 = vld [vmem:[#allocation7 + $0x18] sm:$0xf]
    %v127 = vld [vmem:[#allocation7 + $0x1c] sm:$0xf]
    %v128 = vld [vmem:[%s3] sm:$0x7]
    %v129 = vlaneseq
    %v130 = vshrl.u32 %v129, 7
    %v131 = vsub.s32 0, %v130
    %v132 = vrot.slane %v128, %v131
    %v141 = vunpack.c.l.b16 %v120
    %v142 = vunpack.c.l.b16 %v121
    %v143 = vunpack.c.l.b16 %v122
    %v144 = vunpack.c.l.b16 %v123
    %v145 = vunpack.c.l.b16 %v124
    %v146 = vunpack.c.l.b16 %v125
    %v147 = vunpack.c.l.b16 %v126
    %v148 = vunpack.c.l.b16 %v127
    %v149 = vpack.c.b16 %v142, %v141
    %v150 = vpack.c.b16 %v144, %v143
    %v151 = vpack.c.b16 %v146, %v145
    %v152 = vpack.c.b16 %v148, %v147
    %vm157 = vcmask 523264
    %v159 = vsel %vm157, %v119, 0
    %161 = vmatprep.subr.bf16.mxu0 0
    %162 = vmatpush1.bf16.msra.mxu0 %v149
    %163 = vmatprep.subr.bf16.mxu0 0
    %164 = vmatpush1.bf16.msra.mxu0 %v150
    %165 = vmatprep.subr.bf16.mxu0 0
    %166 = vmatpush1.bf16.msra.mxu0 %v151
    %167 = vmatprep.subr.bf16.mxu0 0
    %168 = vmatpush1.bf16.msra.mxu0 %v152
    %169 = vmatprep.subr.bf16.mxu0 0
    %170 = vmatpush1.bf16.msra.mxu0 0
    %171 = vmatprep.subr.bf16.mxu0 0
    %172 = vmatpush1.bf16.msra.mxu0 0
    %173 = vmatprep.subr.bf16.mxu0 0
    %174 = vmatpush1.bf16.msra.mxu0 0
    %175 = vmatprep.subr.bf16.mxu0 0
    %176 = vmatpush1.bf16.msra.mxu0 0
    %177 = vmatprep.subr.bf16.mxu0 0
    %178 = vmatpush1.bf16.msra.mxu0 0
    %179 = vmatprep.subr.bf16.mxu0 0
    %180 = vmatpush1.bf16.msra.mxu0 0
    %181 = vmatprep.subr.bf16.mxu0 0
    %182 = vmatpush1.bf16.msra.mxu0 0
    %183 = vmatprep.subr.bf16.mxu0 0
    %184 = vmatpush1.bf16.msra.mxu0 0
    %185 = vmatprep.subr.bf16.mxu0 0
    %186 = vmatpush1.bf16.msra.mxu0 0
    %187 = vmatprep.subr.bf16.mxu0 0
    %188 = vmatpush1.bf16.msra.mxu0 0
    %189 = vmatprep.subr.bf16.mxu0 0
    %190 = vmatpush1.bf16.msra.mxu0 0
    %191 = vmatprep.subr.bf16.mxu0 0
    %192 = vmatpush1.bf16.msra.mxu0 0
    %193 = vmatprep.mubr.bf16.mxu0 0
    %194 = vmatmul.mubr.bf16.gmra.mrb[0].mxu0 %v159
    %v195 = vpop.f32.mrb[0].mxu0
    %v196 = vadd.f32 %v132, %v195
    %v197 = vpop.f32.mrb[0].mxu0
    %v198 = vpop.f32.mrb[0].mxu0
    %v199 = vpop.f32.mrb[0].mxu0
    %200 = vdwg.mxu0
    %v201 = vsel %vm75, %v196, 0.0
    %202 = vadd.xlane.f32.xlu0 %v201
    %v203 = vpop.xlane.xlu0 %202
    %v204 = vrcp.pop 32.0
    %v205 = vmul.f32 %v203, %v204
    %v206 = vsub.f32 %v196, %v205
    %v207 = vmul.f32 %v206, %v206
    %v208 = vsel %vm75, %v207, 0.0
    %209 = vadd.xlane.f32.xlu0 %v208
    %v210 = vpop.xlane.xlu0 %209
    %v211 = vmul.f32 %v210, %v204
    %v212 = vadd.f32 %v211, 1e-05
    %v213 = vrsqrt.pop %v212
    %v214 = vmul.f32 %v206, %v213
    %216 = vrot.lane.b32.xlu0 %v196, 96
    %v217 = vpop.permute.xlu0 %216
    %v219 = vsel %vm75, %v217, 0.0
    %220 = vadd.xlane.f32.xlu0 %v219
    %v221 = vpop.xlane.xlu0 %220
    %v222 = vmul.f32 %v221, %v204
    %v223 = vsub.f32 %v196, %v222
    %v224 = vmul.f32 %v223, %v223
    %226 = vrot.lane.b32.xlu0 %v224, 96
    %v227 = vpop.permute.xlu0 %226
    %v229 = vsel %vm75, %v227, 0.0
    %230 = vadd.xlane.f32.xlu0 %v229
    %v231 = vpop.xlane.xlu0 %230
    %v232 = vmul.f32 %v231, %v204
    %v233 = vadd.f32 %v232, 1e-05
    %v234 = vrsqrt.pop %v233
    %v235 = vmul.f32 %v223, %v234
    %236 = vrot.lane.b32.xlu0 %v196, 64
    %v237 = vpop.permute.xlu0 %236
    %v239 = vsel %vm75, %v237, 0.0
    %240 = vadd.xlane.f32.xlu0 %v239
    %v241 = vpop.xlane.xlu0 %240
    %v242 = vmul.f32 %v241, %v204
    %v243 = vsub.f32 %v196, %v242
    %v244 = vmul.f32 %v243, %v243
    %246 = vrot.lane.b32.xlu0 %v244, 64
    %v247 = vpop.permute.xlu0 %246
    %v249 = vsel %vm75, %v247, 0.0
    %250 = vadd.xlane.f32.xlu0 %v249
    %v251 = vpop.xlane.xlu0 %250
    %v252 = vmul.f32 %v251, %v204
    %v253 = vadd.f32 %v252, 1e-05
    %v254 = vrsqrt.pop %v253
    %v255 = vmul.f32 %v243, %v254
    %256 = vrot.lane.b32.xlu0 %v196, 32
    %v257 = vpop.permute.xlu0 %256
    %v259 = vsel %vm75, %v257, 0.0
    %260 = vadd.xlane.f32.xlu0 %v259
    %v261 = vpop.xlane.xlu0 %260
    %v262 = vmul.f32 %v261, %v204
    %v263 = vsub.f32 %v196, %v262
    %v264 = vmul.f32 %v263, %v263
    %266 = vrot.lane.b32.xlu0 %v264, 32
    %v267 = vpop.permute.xlu0 %266
    %v269 = vsel %vm75, %v267, 0.0
    %270 = vadd.xlane.f32.xlu0 %v269
    %v271 = vpop.xlane.xlu0 %270
    %v272 = vmul.f32 %v271, %v204
    %v273 = vadd.f32 %v272, 1e-05
    %v274 = vrsqrt.pop %v273
    %v275 = vmul.f32 %v263, %v274
    %v276 = vsel %vm75, %v214, %v235
    %v277 = vsel %vm157, %v276, %v255
    %vm278 = vcmask 785408
    %v279 = vsel %vm278, %v277, %v275
    %v280 = vlaneseq
    %v281 = vshrl.u32 %v280, 7
    %v282 = vsub.s32 1, %v281
    %v283 = vrot.slane %v128, %v282
    %v284 = vmul.f32 %v279, %v283
    %v285 = vlaneseq
    %v286 = vshrl.u32 %v285, 7
    %v287 = vsub.s32 2, %v286
    %v288 = vrot.slane %v128, %v287
    %v289 = vadd.f32 %v284, %v288
    %290 = vst [vmem:[#allocation8] sm:$0xff] %v289
    // Predicated region
    $region30: #{tpu_custom_call.1} parent=1 // pred_check
      _
    $region31: #{tpu_custom_call.1} parent=1 // pred_check_branch
      %292 = sbr.rel (0) target = $region33
    $region32: #{tpu_custom_call.1} parent=1 // pred_region
      %s294 = ssub.s32 128, 128
      %295 = vsyncadd [#allocation4], %s294
      %s297 = sshll.u32 [#allocation8], 4
      %s298 = int_to_ptr.vmem [resolvable:$true] %s297
      %300 = dma.vmem_to_hbm [thread:$0]  %s298, 128, %s4, [#allocation4]
    $region33: #{tpu_custom_call.1} parent=1 // pred_fallthru
      _
    // Predicated region
    $region34: #{tpu_custom_call.1} parent=1 // pred_check
      _
    $region35: #{tpu_custom_call.1} parent=1 // pred_check_branch
      %302 = sbr.rel (0) target = $region37
    $region36: #{tpu_custom_call.1} parent=1 // pred_region
      %303 = dma.done [#allocation4], 128
    $region37: #{tpu_custom_call.1} parent=1 // pred_fallthru
      _
    %304 = vsyncpa [#allocation3], 1
    %305 = vsyncpa [#allocation6], 1
    %306 = vsyncpa [#allocation4], 1

</llo_original>
